<compile_context>
chip_gen: v5e
topology: v5e:2x2
jax: 0.10.0
libtpu: 0.0.40
codegen_flags: <defaults>
</compile_context>

<pallas_src>
import functools

import jax
import jax.numpy as jnp
from jax.experimental import pallas as pl
from jax.experimental.pallas import tpu as pltpu

LANE = 128   # lane-dense padded width for the hidden / hazard slabs
HID = 32     # true hidden width after the folded affine chain (pre-ReLU)
FEAT = 64    # fused feature width (32 patch + 32 seg)


# ----------------------------------------------------------------------------
# Pallas kernel: folded classifier head on pre-fused features.
#   feats (TB,64) --MXU--> (TB,128) affine --VPU--> ReLU --VPU--> 32->1 reduce
#   lane 32 of the padded hidden carries a constant 1.0 whose reduction weight
#   is b4, so the final bias needs no separate ref.
# ----------------------------------------------------------------------------
def fusion_head_kernel(feats_ref, w_ref, b_ref, v_ref, hazard_ref):
    x = feats_ref[...]                                          # (TB, 64)  f32
    h = jnp.dot(x, w_ref[...],
                preferred_element_type=jnp.float32) + b_ref[...]  # (TB, 128)
    h = jnp.maximum(h, 0.0)                                     # ReLU
    hz = jnp.sum(h * v_ref[...], axis=-1, keepdims=True)        # (TB, 1)
    # Lane-dense store (full 128-lane vreg rows; wrapper slices column 0).
    hazard_ref[...] = jnp.broadcast_to(hz, hazard_ref.shape).astype(hazard_ref.dtype)


# ----------------------------------------------------------------------------
# Wrapper-side parameter prep: BN fold + full pre-ReLU affine fold (f32).
# PyTorch Linear weights (out,in) are assumed already transposed to (in,out).
# ----------------------------------------------------------------------------
def prepare_inference_params(p, eps=1e-5):
    hp = jax.lax.Precision.HIGHEST
    # Eval-mode BatchNorm1d(32) folded into the third linear.
    scale = p["bn_gamma"] * jax.lax.rsqrt(p["bn_var"] + eps)                  # (1, 32)
    w3f = p["w3"] * scale                                                     # (64, 32)
    b3f = (p["b3"] - p["bn_mean"]) * scale + p["bn_beta"]                     # (1, 32)
    # Full affine fold of Linear(64,1024) -> Linear(1024,64) -> Linear(64,32)+BN.
    w12 = jnp.dot(p["w1"], p["w2"], precision=hp)                             # (64, 64)
    w_eff = jnp.dot(w12, w3f, precision=hp)                                   # (64, 32)
    b_eff = (jnp.dot(jnp.dot(p["b1"], p["w2"], precision=hp) + p["b2"],
                     w3f, precision=hp) + b3f)                                # (1, 32)
    # Lane-dense 128-wide slabs. Lane HID (=32) is the "constant-1" lane:
    # pre-ReLU value 1.0 (zero weight column, bias 1) survives ReLU and is
    # weighted by b4 in the reduction row; lanes 33..127 are exact zeros.
    w_pad = jnp.zeros((FEAT, LANE), jnp.float32).at[:, :HID].set(w_eff)
    b_pad = (jnp.zeros((1, LANE), jnp.float32)
             .at[:, :HID].set(b_eff)
             .at[0, HID].set(1.0))
    v_pad = (jnp.zeros((1, LANE), jnp.float32)
             .at[:, :HID].set(p["w4"].T)
             .at[0, HID].set(p["b4"][0, 0]))
    return {"w_pad": w_pad, "b_pad": b_pad, "v_pad": v_pad}


# ----------------------------------------------------------------------------
# Forward: returns (features, hazard) exactly like FusionNet.forward.
# ----------------------------------------------------------------------------
def fusion_forward(patch_vec, seg_vec, kp, max_batch_tile=256):
    # torch.cat([patch_vec, seg_vec], dim=1) — done once in the wrapper; this
    # array IS the `features` return value (no redundant kernel output).
    feats = jnp.concatenate([patch_vec, seg_vec], axis=1)                     # (B, 64)
    B = feats.shape[0]

    # Batch tile: 8-row aligned, capped at 256 (MXU-M friendly on v6e/v7x).
    TB = min(max_batch_tile, max(8, ((B + 7) // 8) * 8))
    Bp = ((B + TB - 1) // TB) * TB
    feats_p = feats if Bp == B else jnp.pad(feats, ((0, Bp - B), (0, 0)))
    grid = (Bp // TB,)

    args = (feats_p, kp["w_pad"], kp["b_pad"], kp["v_pad"])
    flops = 2 * Bp * FEAT * LANE + 4 * Bp * LANE
    bytes_accessed = (sum(int(a.size) * a.dtype.itemsize for a in args)
                      + Bp * LANE * 4)

    hazard_pad = pl.pallas_call(
        fusion_head_kernel,
        out_shape=jax.ShapeDtypeStruct((Bp, LANE), jnp.float32),
        grid_spec=pltpu.PrefetchScalarGridSpec(
            num_scalar_prefetch=0,
            grid=grid,
            in_specs=[
                pl.BlockSpec((TB, FEAT), lambda i: (i, 0)),     # feats tiled over B
                pl.BlockSpec((FEAT, LANE), lambda i: (0, 0)),   # pinned weights
                pl.BlockSpec((1, LANE), lambda i: (0, 0)),      # pinned bias row
                pl.BlockSpec((1, LANE), lambda i: (0, 0)),      # pinned reduce row
            ],
            out_specs=pl.BlockSpec((TB, LANE), lambda i: (i, 0)),
        ),
        compiler_params=pltpu.CompilerParams(
            dimension_semantics=("parallel",)),                 # megacore on v7x
        cost_estimate=pl.CostEstimate(
            flops=flops, transcendentals=0, bytes_accessed=bytes_accessed),
    )(*args)

    hazard = hazard_pad[:B, :1]                                               # (B, 1)
    return feats, hazard


# ----------------------------------------------------------------------------
# Deterministic parameter construction (synthetic; checkpoints not loaded).
# PyTorch Linear weight (out, in) is stored transposed to (in, out).
# ----------------------------------------------------------------------------
def init_params(key):
    ks = jax.random.split(key, 8)

    def lin(k, fan_in, fan_out):
        kw, kb = jax.random.split(k)
        w = jax.random.normal(kw, (fan_in, fan_out), jnp.float32) * 0.02
        b = jax.random.normal(kb, (1, fan_out), jnp.float32) * 0.01
        return w, b

    w1, b1 = lin(ks[0], 64, 1024)
    w2, b2 = lin(ks[1], 1024, 64)
    w3, b3 = lin(ks[2], 64, 32)
    w4, b4 = lin(ks[3], 32, 1)
    return {
        "w1": w1, "b1": b1,
        "w2": w2, "b2": b2,
        "w3": w3, "b3": b3,
        "w4": w4, "b4": b4,
        # BatchNorm1d(32) eval-mode stats / affine params.
        "bn_gamma": jnp.ones((1, 32), jnp.float32),
        "bn_beta": jnp.zeros((1, 32), jnp.float32),
        "bn_mean": jnp.zeros((1, 32), jnp.float32),
        "bn_var": jnp.ones((1, 32), jnp.float32),
        # TODO(synk): patchnet / segnet backbones are loaded from checkpoints in the
        # original file and their architectures are not defined there; a deterministic
        # surrogate (global-average-pool + linear -> 32) stands in for each.
        "patch_proj": jax.random.normal(ks[4], (3, 32), jnp.float32) * 0.1,
        "seg_proj": jax.random.normal(ks[5], (1, 32), jnp.float32) * 0.1,
    }


def surrogate_backbone(x_nchw, proj):
    # Plain-JAX glue standing in for the frozen, checkpoint-loaded backbone:
    # global average pool over H,W then a linear projection to a 32-d vector.
    pooled = jnp.mean(x_nchw, axis=(2, 3))          # (B, C)
    return pooled @ proj                            # (B, 32)


def reference_forward(patch_vec, seg_vec, p, eps=1e-5):
    # Pure-JAX f32 reference of the ORIGINAL (unfolded) eval-mode module.
    hp = jax.lax.Precision.HIGHEST
    feats = jnp.concatenate([patch_vec, seg_vec], axis=1)
    h = jnp.dot(feats, p["w1"], precision=hp) + p["b1"]
    h = jnp.dot(h, p["w2"], precision=hp) + p["b2"]
    h = jnp.dot(h, p["w3"], precision=hp) + p["b3"]
    scale = p["bn_gamma"] * jax.lax.rsqrt(p["bn_var"] + eps)
    h = (h - p["bn_mean"]) * scale + p["bn_beta"]
    h = jnp.maximum(h, 0.0)
    hz = jnp.dot(h, p["w4"], precision=hp) + p["b4"]
    return feats, hz


if __name__ == "__main__":
    key = jax.random.PRNGKey(0)
    kp_key, kx1, kx2 = jax.random.split(key, 3)
    params = init_params(kp_key)
    kparams = prepare_inference_params(params)

    B = 8
    # NCHW inputs (PyTorch convention) for the two modalities.
    x_patch = jax.random.normal(kx1, (B, 3, 16, 16), jnp.float32)
    x_seg = jax.random.normal(kx2, (B, 1, 16, 16), jnp.float32)

    patch_vec = surrogate_backbone(x_patch, params["patch_proj"])   # (B, 32)
    seg_vec = surrogate_backbone(x_seg, params["seg_proj"])         # (B, 32)

    features, hazard = fusion_forward(patch_vec, seg_vec, kparams)
    features = jax.block_until_ready(features)
    hazard = jax.block_until_ready(hazard)

    ref_feats, ref_hazard = reference_forward(patch_vec, seg_vec, params)
    assert features.shape == (B, 64) and hazard.shape == (B, 1)
    assert jnp.allclose(features, ref_feats, atol=1e-6, rtol=1e-6)
    assert jnp.allclose(hazard, ref_hazard, atol=1e-4, rtol=1e-3), (
        jnp.max(jnp.abs(hazard - ref_hazard)))

    print("KERNEL_OK")
</pallas_src>

<mosaic_0001>
module attributes {stable_mosaic.version = 11 : i64} {
  func.func @fusion_head_kernel(%arg0: i32, %arg1: memref<8x64xf32, #tpu.memory_space<vmem>>, %arg2: memref<64x128xf32, #tpu.memory_space<vmem>>, %arg3: memref<1x128xf32, #tpu.memory_space<vmem>>, %arg4: memref<1x128xf32, #tpu.memory_space<vmem>>, %arg5: memref<8x128xf32, #tpu.memory_space<vmem>>) attributes {dimension_semantics = [#tpu.dimension_semantics<parallel>], iteration_bounds = array<i64: 1>, scalar_prefetch = 0 : i64, scratch_operands = 0 : i64, tpu.core_type = #tpu.core_type<tc>, window_params = [{transform_indices = @transform_0, window_bounds = array<i64: 8, 64>}, {pipeline_mode = #tpu.pipeline_mode<synchronous>, transform_indices = @transform_1, window_bounds = array<i64: 64, 128>}, {pipeline_mode = #tpu.pipeline_mode<synchronous>, transform_indices = @transform_2, window_bounds = array<i64: 1, 128>}, {pipeline_mode = #tpu.pipeline_mode<synchronous>, transform_indices = @transform_3, window_bounds = array<i64: 1, 128>}, {transform_indices = @transform_4, window_bounds = array<i64: 8, 128>}]} {
    %c0 = arith.constant 0 : index
    %c0_0 = arith.constant 0 : index
    %0 = vector.load %arg1[%c0, %c0_0] : memref<8x64xf32, #tpu.memory_space<vmem>>, vector<8x64xf32>
    %c0_1 = arith.constant 0 : index
    %c0_2 = arith.constant 0 : index
    %1 = vector.load %arg2[%c0_1, %c0_2] : memref<64x128xf32, #tpu.memory_space<vmem>>, vector<64x128xf32>
    %cst = arith.constant dense<0.000000e+00> : vector<8x128xf32>
    %2 = tpu.matmul %0, %1, %cst {dimension_numbers = #tpu.dot_dimension_numbers<[1], [0], [0], [1], [0, 0, 1, 1], [], []>} : vector<8x64xf32>, vector<64x128xf32>, vector<8x128xf32> -> vector<8x128xf32>
    %c0_3 = arith.constant 0 : index
    %c0_4 = arith.constant 0 : index
    %3 = vector.load %arg3[%c0_3, %c0_4] : memref<1x128xf32, #tpu.memory_space<vmem>>, vector<1x128xf32>
    %4 = vector.broadcast %3 : vector<1x128xf32> to vector<8x128xf32>
    %5 = arith.addf %2, %4 : vector<8x128xf32>
    %cst_5 = arith.constant 0.000000e+00 : f32
    %6 = vector.broadcast %cst_5 : f32 to vector<8x128xf32>
    %7 = arith.maximumf %5, %6 : vector<8x128xf32>
    %c0_6 = arith.constant 0 : index
    %c0_7 = arith.constant 0 : index
    %8 = vector.load %arg4[%c0_6, %c0_7] : memref<1x128xf32, #tpu.memory_space<vmem>>, vector<1x128xf32>
    %9 = vector.broadcast %8 : vector<1x128xf32> to vector<8x128xf32>
    %10 = arith.mulf %7, %9 : vector<8x128xf32>
    %cst_8 = arith.constant dense<0.000000e+00> : vector<8xf32>
    %11 = vector.multi_reduction <add>, %10, %cst_8 [1] : vector<8x128xf32> to vector<8xf32>
    %12 = vector.shape_cast %11 : vector<8xf32> to vector<8x1xf32>
    %13 = vector.shape_cast %12 : vector<8x1xf32> to vector<8x1xf32>
    %14 = vector.broadcast %13 : vector<8x1xf32> to vector<8x128xf32>
    %c0_9 = arith.constant 0 : index
    %c0_10 = arith.constant 0 : index
    %15 = vector.load %arg5[%c0_9, %c0_10] : memref<8x128xf32, #tpu.memory_space<vmem>>, vector<8x128xf32>
    tpu.vector_store %arg5[%c0_9, %c0_10], %14 {strides = array<i32>} : memref<8x128xf32, #tpu.memory_space<vmem>>, vector<8x128xf32>,
    return
  }
  func.func @transform_0(%arg0: i32) -> (i32, i32) {
    %c0_i32 = arith.constant 0 : i32
    %c0_i32_0 = arith.constant 0 : i32
    return %arg0, %c0_i32 : i32, i32
  }
  func.func @transform_1(%arg0: i32) -> (i32, i32) {
    %c0_i32 = arith.constant 0 : i32
    %c0_i32_0 = arith.constant 0 : i32
    %c0_i32_1 = arith.constant 0 : i32
    return %c0_i32, %c0_i32_0 : i32, i32
  }
  func.func @transform_2(%arg0: i32) -> (i32, i32) {
    %c0_i32 = arith.constant 0 : i32
    %c0_i32_0 = arith.constant 0 : i32
    %c0_i32_1 = arith.constant 0 : i32
    return %c0_i32, %c0_i32_0 : i32, i32
  }
  func.func @transform_3(%arg0: i32) -> (i32, i32) {
    %c0_i32 = arith.constant 0 : i32
    %c0_i32_0 = arith.constant 0 : i32
    %c0_i32_1 = arith.constant 0 : i32
    return %c0_i32, %c0_i32_0 : i32, i32
  }
  func.func @transform_4(%arg0: i32) -> (i32, i32) {
    %c0_i32 = arith.constant 0 : i32
    %c0_i32_0 = arith.constant 0 : i32
    return %arg0, %c0_i32 : i32, i32
  }
}

</mosaic_0001>

<llo_original>
// kernel: tpu_custom_call.1
$region0: #{tpu_custom_call.1}
  #allocation0 [shape = 'u32[]', space=smem, size = 0x4, offset = 0x4, fixed_abs, tag = 'smem constant byte address 0x4 - core index']
  #allocation1 [shape = 'u32[72,128]{1,0:T(1,128)}', space=vmem, size = 0x9000, scoped, tag = 'internal scratch']
  %s0 = inlined_call_operand.hbm [shape: f32[8,64], index: 0, kind: input, shape index: {}]
  %s1 = inlined_call_operand.hbm [shape: f32[64,128], index: 1, kind: input, shape index: {}]
  %s2 = inlined_call_operand.vmem [shape: f32[1,128], index: 2, kind: input, shape index: {}]
  %s3 = inlined_call_operand.vmem [shape: f32[1,128], index: 3, kind: input, shape index: {}]
  %s4 = inlined_call_operand.hbm [shape: f32[8,128], index: 4, kind: output, shape index: {}]
  %s5 = sld [smem:[#allocation0]]
  $region34: #{tpu_custom_call.1} parent=0
    _
  %s7 = ssub.s32 1, %s5
  %s8 = scalar_select 0, %s7, %s5
  $region1: #{tpu_custom_call.1} parent=0
    #allocation2 [shape = 'u8[4096]{0}', space=vmem, size = 0x1000, scoped, tag = 'input window, operand 0, single buffered']
    #allocation3 [shape = 's32[1]{0}', space=sflag, size = 0x4, scoped, tag = 'scoped memory for tpu_custom_call.1']
    #allocation4 [shape = 's32[1]{0}', space=sflag, size = 0x4, scoped, tag = 'scoped memory for tpu_custom_call.1']
    #allocation5 [shape = 'u8[32768]{0}', space=vmem, size = 0x8000, scoped, tag = 'input window, operand 1, single buffered']
    #allocation6 [shape = 's32[1]{0}', space=sflag, size = 0x4, scoped, tag = 'scoped memory for tpu_custom_call.1']
    #allocation7 [shape = 'u8[4096]{0}', space=vmem, size = 0x1000, scoped, tag = 'output window, operand 0, single buffered']
    %9 = vsyncpa [#allocation3], 0
    %10 = vsyncpa [#allocation6], 0
    %11 = vsyncpa [#allocation4], 0
    // Predicated region
    $region2: #{tpu_custom_call.1} parent=1 // pred_check
      _
    $region3: #{tpu_custom_call.1} parent=1 // pred_check_branch
      %13 = sbr.rel (0) target = $region5
    $region4: #{tpu_custom_call.1} parent=1 // pred_region
      %15 = vsyncadd [#allocation3], 0
      %s17 = sshll.u32 %s0, 4
      %s18 = int_to_ptr.hbm [resolvable:$true] %s17
      %s19 = sshll.u32 [#allocation2], 4
      %s20 = int_to_ptr.vmem [resolvable:$true] %s19
      %22 = dma.hbm_to_vmem [thread:$0]  %s18, 128, %s20, [#allocation3]
    $region5: #{tpu_custom_call.1} parent=1 // pred_fallthru
      _
    // Predicated region
    $region6: #{tpu_custom_call.1} parent=1 // pred_check
      _
    $region7: #{tpu_custom_call.1} parent=1 // pred_check_branch
      %24 = sbr.rel (0) target = $region9
    $region8: #{tpu_custom_call.1} parent=1 // pred_region
      %26 = vsyncadd [#allocation6], 0
      %s27 = sshll.u32 %s1, 4
      %s28 = int_to_ptr.hbm [resolvable:$true] %s27
      %s29 = sshll.u32 [#allocation5], 4
      %s30 = int_to_ptr.vmem [resolvable:$true] %s29
      %35 = dma.hbm_to_vmem [thread:$0]  %s28, 1024, %s30, [#allocation6], 128, 128, 8
    $region9: #{tpu_custom_call.1} parent=1 // pred_fallthru
      _
    // Predicated region
    $region10: #{tpu_custom_call.1} parent=1 // pred_check
      _
    $region11: #{tpu_custom_call.1} parent=1 // pred_check_branch
      %37 = sbr.rel (0) target = $region13
    $region12: #{tpu_custom_call.1} parent=1 // pred_region
      _
    $region13: #{tpu_custom_call.1} parent=1 // pred_fallthru
      _
    // Predicated region
    $region14: #{tpu_custom_call.1} parent=1 // pred_check
      _
    $region15: #{tpu_custom_call.1} parent=1 // pred_check_branch
      %39 = sbr.rel (0) target = $region17
    $region16: #{tpu_custom_call.1} parent=1 // pred_region
      _
    $region17: #{tpu_custom_call.1} parent=1 // pred_fallthru
      _
    // Predicated region
    $region18: #{tpu_custom_call.1} parent=1 // pred_check
      _
    $region19: #{tpu_custom_call.1} parent=1 // pred_check_branch
      %41 = sbr.rel (0) target = $region21
    $region20: #{tpu_custom_call.1} parent=1 // pred_region
      %43 = dma.done [#allocation3], 128
    $region21: #{tpu_custom_call.1} parent=1 // pred_fallthru
      _
    // Predicated region
    $region22: #{tpu_custom_call.1} parent=1 // pred_check
      _
    $region23: #{tpu_custom_call.1} parent=1 // pred_check_branch
      %45 = sbr.rel (0) target = $region25
    $region24: #{tpu_custom_call.1} parent=1 // pred_region
      %47 = dma.done [#allocation6], 1024
    $region25: #{tpu_custom_call.1} parent=1 // pred_fallthru
      _
    %v48 = vld [vmem:[#allocation2] sm:$0xff]
    %v49 = vld [vmem:[#allocation5] sm:$0xff]
    %v50 = vld [vmem:[#allocation5 + $0x8] sm:$0xff]
    %v51 = vld [vmem:[#allocation5 + $0x10] sm:$0xff]
    %v52 = vld [vmem:[#allocation5 + $0x18] sm:$0xff]
    %v53 = vld [vmem:[#allocation5 + $0x20] sm:$0xff]
    %v54 = vld [vmem:[#allocation5 + $0x28] sm:$0xff]
    %v55 = vld [vmem:[#allocation5 + $0x30] sm:$0xff]
    %v56 = vld [vmem:[#allocation5 + $0x38] sm:$0xff]
    %v57 = vld [vmem:[%s2] sm:$0x1]
    %v59 = vperm.slane %v57, 0
    %vm61 = vcmask 523264
    %v63 = vsel %vm61, %v48, 0
    %65 = vmatpush.msra.mxu0 0.0
    %66 = vmatpush.msra.mxu0 0.0
    %67 = vmatpush.msra.mxu0 0.0
    %68 = vmatpush.msra.mxu0 0.0
    %69 = vmatpush.msra.mxu0 0.0
    %70 = vmatpush.msra.mxu0 0.0
    %71 = vmatpush.msra.mxu0 0.0
    %72 = vmatpush.msra.mxu0 0.0
    %73 = vmatpush.msra.mxu0 %v56
    %74 = vmatpush.msra.mxu0 %v55
    %75 = vmatpush.msra.mxu0 %v54
    %76 = vmatpush.msra.mxu0 %v53
    %77 = vmatpush.msra.mxu0 %v52
    %78 = vmatpush.msra.mxu0 %v51
    %79 = vmatpush.msra.mxu0 %v50
    %80 = vmatpush.msra.mxu0 %v49
    %81 = vmatmul.f32.gmra.mxu0 %v63
    %v82 = vpop.f32.mrf.mxu0
    %v83 = vadd.f32 %v59, %v82
    %84 = vdwg.mxu0
    %v85 = vmax.f32 %v83, 0.0
    %v86 = vld [vmem:[%s3] sm:$0x1]
    %v88 = vperm.slane %v86, 0
    %v90 = vmul.f32 %v85, %v88
    %91 = vadd.xlane.f32.xlu0 %v90
    %v92 = vpop.xlane.xlu0 %91
    %93 = vst [vmem:[#allocation7] sm:$0xff] %v92
    // Predicated region
    $region26: #{tpu_custom_call.1} parent=1 // pred_check
      _
    $region27: #{tpu_custom_call.1} parent=1 // pred_check_branch
      %95 = sbr.rel (0) target = $region29
    $region28: #{tpu_custom_call.1} parent=1 // pred_region
      %97 = vsyncadd [#allocation4], 0
      %s99 = sshll.u32 [#allocation7], 4
      %s100 = int_to_ptr.vmem [resolvable:$true] %s99
      %s101 = sshll.u32 %s4, 4
      %s102 = int_to_ptr.hbm [resolvable:$true] %s101
      %104 = dma.vmem_to_hbm [thread:$0]  %s100, 128, %s102, [#allocation4]
    $region29: #{tpu_custom_call.1} parent=1 // pred_fallthru
      _
    // Predicated region
    $region30: #{tpu_custom_call.1} parent=1 // pred_check
      _
    $region31: #{tpu_custom_call.1} parent=1 // pred_check_branch
      %106 = sbr.rel (0) target = $region33
    $region32: #{tpu_custom_call.1} parent=1 // pred_region
      %108 = dma.done [#allocation4], 128
    $region33: #{tpu_custom_call.1} parent=1 // pred_fallthru
      _
    %109 = vsyncpa [#allocation3], 1
    %110 = vsyncpa [#allocation6], 1
    %111 = vsyncpa [#allocation4], 1

</llo_original>
